<compile_context>
chip_gen: v7x
topology: tpu7x:2x2x1
jax: 0.10.0
libtpu: 0.0.40
codegen_flags: <defaults>
</compile_context>

<pallas_src>
import functools

import jax
import jax.numpy as jnp
from jax import lax
from jax.experimental import pallas as pl
from jax.experimental.pallas import tpu as pltpu  # noqa: F401  (TPU lowering)


def lstm_fc_kernel(x_ref, wih_ref, whh_ref, b_ref, wfc_ref, bfc_ref, out_ref,
                   *, hidden, seq_len):
    """Single-program kernel: full LSTM time loop + relu + final Linear.

    Refs (all resident in VMEM, full-array blocks):
      x_ref   : (T, B, 1)   time-major input series (input_size = 1)
      wih_ref : (1, 4H)     lstm.weight_ih_l0 transposed
      whh_ref : (H, 4H)     lstm.weight_hh_l0 transposed
      b_ref   : (1, 4H)     bias_ih_l0 + bias_hh_l0
      wfc_ref : (1, H)      fc1.weight (row form)
      bfc_ref : (1, 1)      fc1.bias
      out_ref : (B, 1)      prediction
    """
    H = hidden
    T = seq_len
    B = x_ref.shape[1]

    wih = wih_ref[...]            # (1, 4H)
    whh = whh_ref[...]            # (H, 4H)
    b = b_ref[...]                # (1, 4H)

    # Hoisted input projection + bias for ALL timesteps: (T, B, 4H).
    # input_size == 1 -> a single broadcast multiply + add on the VPU; keeps
    # the per-step serial chain down to matmul + activations + cell update.
    x_tb1 = x_ref[...]                                    # (T, B, 1)
    xwb = x_tb1 * wih[None, :, :] + b[None, :, :]         # (T, B, 4H)

    h = jnp.zeros((B, H), jnp.float32)
    c = jnp.zeros((B, H), jnp.float32)

    # Fully unrolled recurrence: only the (B,H)@(H,4H) matmul + activations +
    # cell update sit on the serial h/c dependency chain.
    for t in range(T):
        gates = xwb[t] + jnp.dot(h, whh, preferred_element_type=jnp.float32)  # (B, 4H)
        sg = jax.nn.sigmoid(gates)      # one full-vreg EUP pass
        tg = jnp.tanh(gates)            # one full-vreg EUP pass
        # PyTorch gate order along 4H: i, f, g, o
        i = sg[:, 0:H]
        f = sg[:, H:2 * H]
        g = tg[:, 2 * H:3 * H]
        o = sg[:, 3 * H:4 * H]
        c = f * c + i * g
        h = o * jnp.tanh(c)

    # output[:, -1, :] -> relu -> fc1 (out_features = 1): VPU multiply + XLU
    # lane reduction instead of a degenerate N=1 MXU matmul.
    relu_h = jnp.maximum(h, 0.0)                          # (B, H)
    out = jnp.sum(relu_h * wfc_ref[...], axis=1, keepdims=True) + bfc_ref[...]
    out_ref[...] = out.astype(out_ref.dtype)


def lstm_forward(x, params):
    """x: (B, T, 1) float32 -> (B, 1) float32 (matches PyTorchLSTM.forward)."""
    B, T, _ = x.shape
    H = params["w_hh"].shape[1]

    x_tb1 = jnp.transpose(x, (1, 0, 2))               # (T, B, 1) time-major
    wih_t = params["w_ih"].T                          # (1, 4H)
    whh_t = params["w_hh"].T                          # (H, 4H)
    bias = (params["b_ih"] + params["b_hh"]).reshape(1, 4 * H)
    wfc_row = params["w_fc"].reshape(1, H)            # (1, H)
    bfc = params["b_fc"].reshape(1, 1)

    def full(shape):
        return pl.BlockSpec(shape, lambda: (0,) * len(shape))

    kernel = functools.partial(lstm_fc_kernel, hidden=H, seq_len=T)
    return pl.pallas_call(
        kernel,
        out_shape=jax.ShapeDtypeStruct((B, 1), x.dtype),
        in_specs=[full(x_tb1.shape), full(wih_t.shape), full(whh_t.shape),
                  full(bias.shape), full(wfc_row.shape), full(bfc.shape)],
        out_specs=full((B, 1)),
    )(x_tb1, wih_t, whh_t, bias, wfc_row, bfc)


def lstm_forward_ref(x, params):
    """Pure-JAX reference mirroring torch.nn.LSTM + relu + Linear."""
    B, T, _ = x.shape
    H = params["w_hh"].shape[1]
    wih, whh = params["w_ih"], params["w_hh"]
    b = params["b_ih"] + params["b_hh"]

    def step(carry, x_t):
        h, c = carry
        gates = x_t @ wih.T + h @ whh.T + b
        i = jax.nn.sigmoid(gates[:, 0:H])
        f = jax.nn.sigmoid(gates[:, H:2 * H])
        g = jnp.tanh(gates[:, 2 * H:3 * H])
        o = jax.nn.sigmoid(gates[:, 3 * H:4 * H])
        c = f * c + i * g
        h = o * jnp.tanh(c)
        return (h, c), None

    (h_last, _), _ = lax.scan(step, (jnp.zeros((B, H)), jnp.zeros((B, H))),
                              jnp.transpose(x, (1, 0, 2)))
    out = jnp.maximum(h_last, 0.0) @ params["w_fc"].T + params["b_fc"]
    return out


def init_params(key, h1):
    """Deterministic params with PyTorch-style uniform(-1/sqrt(H), 1/sqrt(H)) init."""
    k = 1.0 / jnp.sqrt(jnp.float32(h1))
    ks = jax.random.split(key, 6)
    u = lambda kk, shape: jax.random.uniform(kk, shape, jnp.float32, -k, k)
    return {
        "w_ih": u(ks[0], (4 * h1, 1)),    # lstm.weight_ih_l0
        "w_hh": u(ks[1], (4 * h1, h1)),   # lstm.weight_hh_l0
        "b_ih": u(ks[2], (4 * h1,)),      # lstm.bias_ih_l0
        "b_hh": u(ks[3], (4 * h1,)),      # lstm.bias_hh_l0
        "w_fc": u(ks[4], (1, h1)),        # fc1.weight
        "b_fc": u(ks[5], (1,)),           # fc1.bias
    }


if __name__ == "__main__":
    H1 = 32    # hidden size -> 4H = 128 lanes (one full f32 vreg width)
    B = 8      # batch       -> exactly 8 sublanes
    T = 8      # sequence length

    key = jax.random.PRNGKey(0)
    k_param, k_x = jax.random.split(key)
    params = init_params(k_param, H1)
    x = jax.random.normal(k_x, (B, T, 1), jnp.float32)

    out = jax.block_until_ready(lstm_forward(x, params))
    ref = jax.block_until_ready(lstm_forward_ref(x, params))

    assert out.shape == (B, 1)
    assert jnp.allclose(out, ref, rtol=1e-4, atol=1e-4)
    print("KERNEL_OK")
</pallas_src>

<mosaic_0001>
module attributes {stable_mosaic.version = 11 : i64} {
  func.func @lstm_fc_kernel(%arg0: memref<8x8x1xf32, #tpu.memory_space<vmem>>, %arg1: memref<1x128xf32, #tpu.memory_space<vmem>>, %arg2: memref<32x128xf32, #tpu.memory_space<vmem>>, %arg3: memref<1x128xf32, #tpu.memory_space<vmem>>, %arg4: memref<1x32xf32, #tpu.memory_space<vmem>>, %arg5: memref<1x1xf32, #tpu.memory_space<vmem>>, %arg6: memref<8x1xf32, #tpu.memory_space<vmem>>) attributes {dimension_semantics = [], scalar_prefetch = 0 : i64, scratch_operands = 0 : i64, tpu.core_type = #tpu.core_type<tc>} {
    %c0 = arith.constant 0 : index
    %c0_0 = arith.constant 0 : index
    %0 = vector.load %arg1[%c0, %c0_0] : memref<1x128xf32, #tpu.memory_space<vmem>>, vector<1x128xf32>
    %c0_1 = arith.constant 0 : index
    %c0_2 = arith.constant 0 : index
    %1 = vector.load %arg2[%c0_1, %c0_2] : memref<32x128xf32, #tpu.memory_space<vmem>>, vector<32x128xf32>
    %c0_3 = arith.constant 0 : index
    %c0_4 = arith.constant 0 : index
    %2 = vector.load %arg3[%c0_3, %c0_4] : memref<1x128xf32, #tpu.memory_space<vmem>>, vector<1x128xf32>
    %c0_5 = arith.constant 0 : index
    %c0_6 = arith.constant 0 : index
    %c0_7 = arith.constant 0 : index
    %3 = vector.load %arg0[%c0_5, %c0_6, %c0_7] : memref<8x8x1xf32, #tpu.memory_space<vmem>>, vector<8x8x1xf32>
    %4 = vector.shape_cast %0 : vector<1x128xf32> to vector<1x1x128xf32>
    %5 = vector.broadcast %3 : vector<8x8x1xf32> to vector<8x8x128xf32>
    %6 = vector.broadcast %4 : vector<1x1x128xf32> to vector<8x8x128xf32>
    %7 = arith.mulf %5, %6 : vector<8x8x128xf32>
    %8 = vector.shape_cast %2 : vector<1x128xf32> to vector<1x1x128xf32>
    %9 = vector.broadcast %8 : vector<1x1x128xf32> to vector<8x8x128xf32>
    %10 = arith.addf %7, %9 : vector<8x8x128xf32>
    %cst = arith.constant 0.000000e+00 : f32
    %11 = vector.broadcast %cst : f32 to vector<8x32xf32>
    %cst_8 = arith.constant 0.000000e+00 : f32
    %12 = vector.broadcast %cst_8 : f32 to vector<8x32xf32>
    %13 = vector.extract_strided_slice %10 {offsets = [0, 0, 0], sizes = [1, 8, 128], strides = [1, 1, 1]} : vector<8x8x128xf32> to vector<1x8x128xf32>
    %14 = vector.shape_cast %13 : vector<1x8x128xf32> to vector<8x128xf32>
    %cst_9 = arith.constant dense<0.000000e+00> : vector<8x128xf32>
    %15 = tpu.matmul %11, %1, %cst_9 {dimension_numbers = #tpu.dot_dimension_numbers<[1], [0], [0], [1], [0, 0, 1, 1], [], []>} : vector<8x32xf32>, vector<32x128xf32>, vector<8x128xf32> -> vector<8x128xf32>
    %16 = arith.addf %14, %15 : vector<8x128xf32>
    %17 = arith.negf %16 : vector<8x128xf32>
    %18 = math.exp %17 : vector<8x128xf32>
    %cst_10 = arith.constant 1.000000e+00 : f32
    %19 = vector.broadcast %cst_10 : f32 to vector<8x128xf32>
    %20 = arith.addf %19, %18 : vector<8x128xf32>
    %21 = arith.divf %19, %20 : vector<8x128xf32>
    %22 = math.tanh %16 : vector<8x128xf32>
    %23 = vector.extract_strided_slice %21 {offsets = [0, 0], sizes = [8, 32], strides = [1, 1]} : vector<8x128xf32> to vector<8x32xf32>
    %24 = vector.extract_strided_slice %21 {offsets = [0, 32], sizes = [8, 32], strides = [1, 1]} : vector<8x128xf32> to vector<8x32xf32>
    %25 = vector.extract_strided_slice %22 {offsets = [0, 64], sizes = [8, 32], strides = [1, 1]} : vector<8x128xf32> to vector<8x32xf32>
    %26 = vector.extract_strided_slice %21 {offsets = [0, 96], sizes = [8, 32], strides = [1, 1]} : vector<8x128xf32> to vector<8x32xf32>
    %27 = arith.mulf %24, %12 : vector<8x32xf32>
    %28 = arith.mulf %23, %25 : vector<8x32xf32>
    %29 = arith.addf %27, %28 : vector<8x32xf32>
    %30 = math.tanh %29 : vector<8x32xf32>
    %31 = arith.mulf %26, %30 : vector<8x32xf32>
    %32 = vector.extract_strided_slice %10 {offsets = [1, 0, 0], sizes = [1, 8, 128], strides = [1, 1, 1]} : vector<8x8x128xf32> to vector<1x8x128xf32>
    %33 = vector.shape_cast %32 : vector<1x8x128xf32> to vector<8x128xf32>
    %cst_11 = arith.constant dense<0.000000e+00> : vector<8x128xf32>
    %34 = tpu.matmul %31, %1, %cst_11 {dimension_numbers = #tpu.dot_dimension_numbers<[1], [0], [0], [1], [0, 0, 1, 1], [], []>} : vector<8x32xf32>, vector<32x128xf32>, vector<8x128xf32> -> vector<8x128xf32>
    %35 = arith.addf %33, %34 : vector<8x128xf32>
    %36 = arith.negf %35 : vector<8x128xf32>
    %37 = math.exp %36 : vector<8x128xf32>
    %cst_12 = arith.constant 1.000000e+00 : f32
    %38 = vector.broadcast %cst_12 : f32 to vector<8x128xf32>
    %39 = arith.addf %38, %37 : vector<8x128xf32>
    %40 = arith.divf %38, %39 : vector<8x128xf32>
    %41 = math.tanh %35 : vector<8x128xf32>
    %42 = vector.extract_strided_slice %40 {offsets = [0, 0], sizes = [8, 32], strides = [1, 1]} : vector<8x128xf32> to vector<8x32xf32>
    %43 = vector.extract_strided_slice %40 {offsets = [0, 32], sizes = [8, 32], strides = [1, 1]} : vector<8x128xf32> to vector<8x32xf32>
    %44 = vector.extract_strided_slice %41 {offsets = [0, 64], sizes = [8, 32], strides = [1, 1]} : vector<8x128xf32> to vector<8x32xf32>
    %45 = vector.extract_strided_slice %40 {offsets = [0, 96], sizes = [8, 32], strides = [1, 1]} : vector<8x128xf32> to vector<8x32xf32>
    %46 = arith.mulf %43, %29 : vector<8x32xf32>
    %47 = arith.mulf %42, %44 : vector<8x32xf32>
    %48 = arith.addf %46, %47 : vector<8x32xf32>
    %49 = math.tanh %48 : vector<8x32xf32>
    %50 = arith.mulf %45, %49 : vector<8x32xf32>
    %51 = vector.extract_strided_slice %10 {offsets = [2, 0, 0], sizes = [1, 8, 128], strides = [1, 1, 1]} : vector<8x8x128xf32> to vector<1x8x128xf32>
    %52 = vector.shape_cast %51 : vector<1x8x128xf32> to vector<8x128xf32>
    %cst_13 = arith.constant dense<0.000000e+00> : vector<8x128xf32>
    %53 = tpu.matmul %50, %1, %cst_13 {dimension_numbers = #tpu.dot_dimension_numbers<[1], [0], [0], [1], [0, 0, 1, 1], [], []>} : vector<8x32xf32>, vector<32x128xf32>, vector<8x128xf32> -> vector<8x128xf32>
    %54 = arith.addf %52, %53 : vector<8x128xf32>
    %55 = arith.negf %54 : vector<8x128xf32>
    %56 = math.exp %55 : vector<8x128xf32>
    %cst_14 = arith.constant 1.000000e+00 : f32
    %57 = vector.broadcast %cst_14 : f32 to vector<8x128xf32>
    %58 = arith.addf %57, %56 : vector<8x128xf32>
    %59 = arith.divf %57, %58 : vector<8x128xf32>
    %60 = math.tanh %54 : vector<8x128xf32>
    %61 = vector.extract_strided_slice %59 {offsets = [0, 0], sizes = [8, 32], strides = [1, 1]} : vector<8x128xf32> to vector<8x32xf32>
    %62 = vector.extract_strided_slice %59 {offsets = [0, 32], sizes = [8, 32], strides = [1, 1]} : vector<8x128xf32> to vector<8x32xf32>
    %63 = vector.extract_strided_slice %60 {offsets = [0, 64], sizes = [8, 32], strides = [1, 1]} : vector<8x128xf32> to vector<8x32xf32>
    %64 = vector.extract_strided_slice %59 {offsets = [0, 96], sizes = [8, 32], strides = [1, 1]} : vector<8x128xf32> to vector<8x32xf32>
    %65 = arith.mulf %62, %48 : vector<8x32xf32>
    %66 = arith.mulf %61, %63 : vector<8x32xf32>
    %67 = arith.addf %65, %66 : vector<8x32xf32>
    %68 = math.tanh %67 : vector<8x32xf32>
    %69 = arith.mulf %64, %68 : vector<8x32xf32>
    %70 = vector.extract_strided_slice %10 {offsets = [3, 0, 0], sizes = [1, 8, 128], strides = [1, 1, 1]} : vector<8x8x128xf32> to vector<1x8x128xf32>
    %71 = vector.shape_cast %70 : vector<1x8x128xf32> to vector<8x128xf32>
    %cst_15 = arith.constant dense<0.000000e+00> : vector<8x128xf32>
    %72 = tpu.matmul %69, %1, %cst_15 {dimension_numbers = #tpu.dot_dimension_numbers<[1], [0], [0], [1], [0, 0, 1, 1], [], []>} : vector<8x32xf32>, vector<32x128xf32>, vector<8x128xf32> -> vector<8x128xf32>
    %73 = arith.addf %71, %72 : vector<8x128xf32>
    %74 = arith.negf %73 : vector<8x128xf32>
    %75 = math.exp %74 : vector<8x128xf32>
    %cst_16 = arith.constant 1.000000e+00 : f32
    %76 = vector.broadcast %cst_16 : f32 to vector<8x128xf32>
    %77 = arith.addf %76, %75 : vector<8x128xf32>
    %78 = arith.divf %76, %77 : vector<8x128xf32>
    %79 = math.tanh %73 : vector<8x128xf32>
    %80 = vector.extract_strided_slice %78 {offsets = [0, 0], sizes = [8, 32], strides = [1, 1]} : vector<8x128xf32> to vector<8x32xf32>
    %81 = vector.extract_strided_slice %78 {offsets = [0, 32], sizes = [8, 32], strides = [1, 1]} : vector<8x128xf32> to vector<8x32xf32>
    %82 = vector.extract_strided_slice %79 {offsets = [0, 64], sizes = [8, 32], strides = [1, 1]} : vector<8x128xf32> to vector<8x32xf32>
    %83 = vector.extract_strided_slice %78 {offsets = [0, 96], sizes = [8, 32], strides = [1, 1]} : vector<8x128xf32> to vector<8x32xf32>
    %84 = arith.mulf %81, %67 : vector<8x32xf32>
    %85 = arith.mulf %80, %82 : vector<8x32xf32>
    %86 = arith.addf %84, %85 : vector<8x32xf32>
    %87 = math.tanh %86 : vector<8x32xf32>
    %88 = arith.mulf %83, %87 : vector<8x32xf32>
    %89 = vector.extract_strided_slice %10 {offsets = [4, 0, 0], sizes = [1, 8, 128], strides = [1, 1, 1]} : vector<8x8x128xf32> to vector<1x8x128xf32>
    %90 = vector.shape_cast %89 : vector<1x8x128xf32> to vector<8x128xf32>
    %cst_17 = arith.constant dense<0.000000e+00> : vector<8x128xf32>
    %91 = tpu.matmul %88, %1, %cst_17 {dimension_numbers = #tpu.dot_dimension_numbers<[1], [0], [0], [1], [0, 0, 1, 1], [], []>} : vector<8x32xf32>, vector<32x128xf32>, vector<8x128xf32> -> vector<8x128xf32>
    %92 = arith.addf %90, %91 : vector<8x128xf32>
    %93 = arith.negf %92 : vector<8x128xf32>
    %94 = math.exp %93 : vector<8x128xf32>
    %cst_18 = arith.constant 1.000000e+00 : f32
    %95 = vector.broadcast %cst_18 : f32 to vector<8x128xf32>
    %96 = arith.addf %95, %94 : vector<8x128xf32>
    %97 = arith.divf %95, %96 : vector<8x128xf32>
    %98 = math.tanh %92 : vector<8x128xf32>
    %99 = vector.extract_strided_slice %97 {offsets = [0, 0], sizes = [8, 32], strides = [1, 1]} : vector<8x128xf32> to vector<8x32xf32>
    %100 = vector.extract_strided_slice %97 {offsets = [0, 32], sizes = [8, 32], strides = [1, 1]} : vector<8x128xf32> to vector<8x32xf32>
    %101 = vector.extract_strided_slice %98 {offsets = [0, 64], sizes = [8, 32], strides = [1, 1]} : vector<8x128xf32> to vector<8x32xf32>
    %102 = vector.extract_strided_slice %97 {offsets = [0, 96], sizes = [8, 32], strides = [1, 1]} : vector<8x128xf32> to vector<8x32xf32>
    %103 = arith.mulf %100, %86 : vector<8x32xf32>
    %104 = arith.mulf %99, %101 : vector<8x32xf32>
    %105 = arith.addf %103, %104 : vector<8x32xf32>
    %106 = math.tanh %105 : vector<8x32xf32>
    %107 = arith.mulf %102, %106 : vector<8x32xf32>
    %108 = vector.extract_strided_slice %10 {offsets = [5, 0, 0], sizes = [1, 8, 128], strides = [1, 1, 1]} : vector<8x8x128xf32> to vector<1x8x128xf32>
    %109 = vector.shape_cast %108 : vector<1x8x128xf32> to vector<8x128xf32>
    %cst_19 = arith.constant dense<0.000000e+00> : vector<8x128xf32>
    %110 = tpu.matmul %107, %1, %cst_19 {dimension_numbers = #tpu.dot_dimension_numbers<[1], [0], [0], [1], [0, 0, 1, 1], [], []>} : vector<8x32xf32>, vector<32x128xf32>, vector<8x128xf32> -> vector<8x128xf32>
    %111 = arith.addf %109, %110 : vector<8x128xf32>
    %112 = arith.negf %111 : vector<8x128xf32>
    %113 = math.exp %112 : vector<8x128xf32>
    %cst_20 = arith.constant 1.000000e+00 : f32
    %114 = vector.broadcast %cst_20 : f32 to vector<8x128xf32>
    %115 = arith.addf %114, %113 : vector<8x128xf32>
    %116 = arith.divf %114, %115 : vector<8x128xf32>
    %117 = math.tanh %111 : vector<8x128xf32>
    %118 = vector.extract_strided_slice %116 {offsets = [0, 0], sizes = [8, 32], strides = [1, 1]} : vector<8x128xf32> to vector<8x32xf32>
    %119 = vector.extract_strided_slice %116 {offsets = [0, 32], sizes = [8, 32], strides = [1, 1]} : vector<8x128xf32> to vector<8x32xf32>
    %120 = vector.extract_strided_slice %117 {offsets = [0, 64], sizes = [8, 32], strides = [1, 1]} : vector<8x128xf32> to vector<8x32xf32>
    %121 = vector.extract_strided_slice %116 {offsets = [0, 96], sizes = [8, 32], strides = [1, 1]} : vector<8x128xf32> to vector<8x32xf32>
    %122 = arith.mulf %119, %105 : vector<8x32xf32>
    %123 = arith.mulf %118, %120 : vector<8x32xf32>
    %124 = arith.addf %122, %123 : vector<8x32xf32>
    %125 = math.tanh %124 : vector<8x32xf32>
    %126 = arith.mulf %121, %125 : vector<8x32xf32>
    %127 = vector.extract_strided_slice %10 {offsets = [6, 0, 0], sizes = [1, 8, 128], strides = [1, 1, 1]} : vector<8x8x128xf32> to vector<1x8x128xf32>
    %128 = vector.shape_cast %127 : vector<1x8x128xf32> to vector<8x128xf32>
    %cst_21 = arith.constant dense<0.000000e+00> : vector<8x128xf32>
    %129 = tpu.matmul %126, %1, %cst_21 {dimension_numbers = #tpu.dot_dimension_numbers<[1], [0], [0], [1], [0, 0, 1, 1], [], []>} : vector<8x32xf32>, vector<32x128xf32>, vector<8x128xf32> -> vector<8x128xf32>
    %130 = arith.addf %128, %129 : vector<8x128xf32>
    %131 = arith.negf %130 : vector<8x128xf32>
    %132 = math.exp %131 : vector<8x128xf32>
    %cst_22 = arith.constant 1.000000e+00 : f32
    %133 = vector.broadcast %cst_22 : f32 to vector<8x128xf32>
    %134 = arith.addf %133, %132 : vector<8x128xf32>
    %135 = arith.divf %133, %134 : vector<8x128xf32>
    %136 = math.tanh %130 : vector<8x128xf32>
    %137 = vector.extract_strided_slice %135 {offsets = [0, 0], sizes = [8, 32], strides = [1, 1]} : vector<8x128xf32> to vector<8x32xf32>
    %138 = vector.extract_strided_slice %135 {offsets = [0, 32], sizes = [8, 32], strides = [1, 1]} : vector<8x128xf32> to vector<8x32xf32>
    %139 = vector.extract_strided_slice %136 {offsets = [0, 64], sizes = [8, 32], strides = [1, 1]} : vector<8x128xf32> to vector<8x32xf32>
    %140 = vector.extract_strided_slice %135 {offsets = [0, 96], sizes = [8, 32], strides = [1, 1]} : vector<8x128xf32> to vector<8x32xf32>
    %141 = arith.mulf %138, %124 : vector<8x32xf32>
    %142 = arith.mulf %137, %139 : vector<8x32xf32>
    %143 = arith.addf %141, %142 : vector<8x32xf32>
    %144 = math.tanh %143 : vector<8x32xf32>
    %145 = arith.mulf %140, %144 : vector<8x32xf32>
    %146 = vector.extract_strided_slice %10 {offsets = [7, 0, 0], sizes = [1, 8, 128], strides = [1, 1, 1]} : vector<8x8x128xf32> to vector<1x8x128xf32>
    %147 = vector.shape_cast %146 : vector<1x8x128xf32> to vector<8x128xf32>
    %cst_23 = arith.constant dense<0.000000e+00> : vector<8x128xf32>
    %148 = tpu.matmul %145, %1, %cst_23 {dimension_numbers = #tpu.dot_dimension_numbers<[1], [0], [0], [1], [0, 0, 1, 1], [], []>} : vector<8x32xf32>, vector<32x128xf32>, vector<8x128xf32> -> vector<8x128xf32>
    %149 = arith.addf %147, %148 : vector<8x128xf32>
    %150 = arith.negf %149 : vector<8x128xf32>
    %151 = math.exp %150 : vector<8x128xf32>
    %cst_24 = arith.constant 1.000000e+00 : f32
    %152 = vector.broadcast %cst_24 : f32 to vector<8x128xf32>
    %153 = arith.addf %152, %151 : vector<8x128xf32>
    %154 = arith.divf %152, %153 : vector<8x128xf32>
    %155 = math.tanh %149 : vector<8x128xf32>
    %156 = vector.extract_strided_slice %154 {offsets = [0, 0], sizes = [8, 32], strides = [1, 1]} : vector<8x128xf32> to vector<8x32xf32>
    %157 = vector.extract_strided_slice %154 {offsets = [0, 32], sizes = [8, 32], strides = [1, 1]} : vector<8x128xf32> to vector<8x32xf32>
    %158 = vector.extract_strided_slice %155 {offsets = [0, 64], sizes = [8, 32], strides = [1, 1]} : vector<8x128xf32> to vector<8x32xf32>
    %159 = vector.extract_strided_slice %154 {offsets = [0, 96], sizes = [8, 32], strides = [1, 1]} : vector<8x128xf32> to vector<8x32xf32>
    %160 = arith.mulf %157, %143 : vector<8x32xf32>
    %161 = arith.mulf %156, %158 : vector<8x32xf32>
    %162 = arith.addf %160, %161 : vector<8x32xf32>
    %163 = math.tanh %162 : vector<8x32xf32>
    %164 = arith.mulf %159, %163 : vector<8x32xf32>
    %cst_25 = arith.constant 0.000000e+00 : f32
    %165 = vector.broadcast %cst_25 : f32 to vector<8x32xf32>
    %166 = arith.maximumf %164, %165 : vector<8x32xf32>
    %c0_26 = arith.constant 0 : index
    %c0_27 = arith.constant 0 : index
    %167 = vector.load %arg4[%c0_26, %c0_27] : memref<1x32xf32, #tpu.memory_space<vmem>>, vector<1x32xf32>
    %168 = vector.broadcast %167 : vector<1x32xf32> to vector<8x32xf32>
    %169 = arith.mulf %166, %168 : vector<8x32xf32>
    %cst_28 = arith.constant dense<0.000000e+00> : vector<8xf32>
    %170 = vector.multi_reduction <add>, %169, %cst_28 [1] : vector<8x32xf32> to vector<8xf32>
    %171 = vector.shape_cast %170 : vector<8xf32> to vector<8x1xf32>
    %c0_29 = arith.constant 0 : index
    %c0_30 = arith.constant 0 : index
    %172 = vector.load %arg5[%c0_29, %c0_30] : memref<1x1xf32, #tpu.memory_space<vmem>>, vector<1x1xf32>
    %173 = vector.broadcast %172 : vector<1x1xf32> to vector<8x1xf32>
    %174 = arith.addf %171, %173 : vector<8x1xf32>
    %c0_31 = arith.constant 0 : index
    %c0_32 = arith.constant 0 : index
    %175 = vector.load %arg6[%c0_31, %c0_32] : memref<8x1xf32, #tpu.memory_space<vmem>>, vector<8x1xf32>
    tpu.vector_store %arg6[%c0_31, %c0_32], %174 {strides = array<i32>} : memref<8x1xf32, #tpu.memory_space<vmem>>, vector<8x1xf32>,
    return
  }
}

</mosaic_0001>

<llo_original>
// kernel: tpu_custom_call.1
$region0: #{tpu_custom_call.1}
  #allocation0 [shape = 'u32[]', space=smem, size = 0x4, offset = 0x4, fixed_abs, tag = 'smem constant byte address 0x4 - core index']
  #allocation1 [shape = 'u32[144,128]{1,0:T(1,128)}', space=vmem, size = 0x12000, scoped, tag = 'internal scratch']
  #allocation2 [shape = 'f32[1,1]{1,0:T(1,128)S(1)}', space=vmem, size = 0x200, scoped, tag = 'scoped memory for tpu_custom_call.1']
  %s0 = inlined_call_operand.vmem [shape: f32[8,8,1], index: 0, kind: input, shape index: {}]
  %s1 = inlined_call_operand.vmem [shape: f32[1,128], index: 1, kind: input, shape index: {}]
  %s2 = inlined_call_operand.vmem [shape: f32[32,128], index: 2, kind: input, shape index: {}]
  %s3 = inlined_call_operand.vmem [shape: f32[1,128], index: 3, kind: input, shape index: {}]
  %s4 = inlined_call_operand.vmem [shape: f32[1,32], index: 4, kind: input, shape index: {}]
  %s5 = inlined_call_operand.<no memory space> [shape: f32[1,1], index: 5, kind: input, shape index: {}]
  %s6 = inlined_call_operand.vmem [shape: f32[8,1], index: 6, kind: output, shape index: {}]
  %s7 = sld [smem:[#allocation0]]
  $region34: #{tpu_custom_call.1} parent=0
    _
  %s9 = ssub.s32 1, %s7
  %s10 = scalar_select 0, %s9, %s7
  %v11 = vstv %s5
  %12 = vst [vmem:[#allocation2] sm:$0x1] %v11
  // Predicated region
  $region2: #{tpu_custom_call.1} parent=0 // pred_check
    _
  $region3: #{tpu_custom_call.1} parent=0 // pred_check_branch
    %14 = sbr.rel (0) target = $region5
  $region4: #{tpu_custom_call.1} parent=0 // pred_region
    _
  $region5: #{tpu_custom_call.1} parent=0 // pred_fallthru
    _
  // Predicated region
  $region6: #{tpu_custom_call.1} parent=0 // pred_check
    _
  $region7: #{tpu_custom_call.1} parent=0 // pred_check_branch
    %16 = sbr.rel (0) target = $region9
  $region8: #{tpu_custom_call.1} parent=0 // pred_region
    _
  $region9: #{tpu_custom_call.1} parent=0 // pred_fallthru
    _
  // Predicated region
  $region10: #{tpu_custom_call.1} parent=0 // pred_check
    _
  $region11: #{tpu_custom_call.1} parent=0 // pred_check_branch
    %18 = sbr.rel (0) target = $region13
  $region12: #{tpu_custom_call.1} parent=0 // pred_region
    _
  $region13: #{tpu_custom_call.1} parent=0 // pred_fallthru
    _
  // Predicated region
  $region14: #{tpu_custom_call.1} parent=0 // pred_check
    _
  $region15: #{tpu_custom_call.1} parent=0 // pred_check_branch
    %20 = sbr.rel (0) target = $region17
  $region16: #{tpu_custom_call.1} parent=0 // pred_region
    _
  $region17: #{tpu_custom_call.1} parent=0 // pred_fallthru
    _
  // Predicated region
  $region18: #{tpu_custom_call.1} parent=0 // pred_check
    _
  $region19: #{tpu_custom_call.1} parent=0 // pred_check_branch
    %22 = sbr.rel (0) target = $region21
  $region20: #{tpu_custom_call.1} parent=0 // pred_region
    _
  $region21: #{tpu_custom_call.1} parent=0 // pred_fallthru
    _
  // Predicated region
  $region22: #{tpu_custom_call.1} parent=0 // pred_check
    _
  $region23: #{tpu_custom_call.1} parent=0 // pred_check_branch
    %24 = sbr.rel (0) target = $region25
  $region24: #{tpu_custom_call.1} parent=0 // pred_region
    _
  $region25: #{tpu_custom_call.1} parent=0 // pred_fallthru
    _
  %v25 = vld [vmem:[%s1] sm:$0x1]
  %v26 = vld [vmem:[%s2] sm:$0xff]
  %v27 = vld [vmem:[%s2 + $0x8] sm:$0xff]
  %v28 = vld [vmem:[%s2 + $0x10] sm:$0xff]
  %v29 = vld [vmem:[%s2 + $0x18] sm:$0xff]
  %v30 = vld [vmem:[%s3] sm:$0x1]
  %v31 = vld [vmem:[%s0] sm:$0xff]
  %v32 = vld [vmem:[%s0 + $0x8] sm:$0xff]
  %v33 = vld [vmem:[%s0 + $0x10] sm:$0xff]
  %v34 = vld [vmem:[%s0 + $0x18] sm:$0xff]
  %v35 = vld [vmem:[%s0 + $0x20] sm:$0xff]
  %v36 = vld [vmem:[%s0 + $0x28] sm:$0xff]
  %v37 = vld [vmem:[%s0 + $0x30] sm:$0xff]
  %v38 = vld [vmem:[%s0 + $0x38] sm:$0xff]
  %40 = vset.pattern.permute.xlu0 0
  %41 = vperm.xlu0 %40, %v31
  %v42 = vpop.permute.xlu0 %41
  %45 = vset.pattern.permute.xlu0 0
  %46 = vperm.xlu0 %45, %v32
  %v47 = vpop.permute.xlu0 %46
  %50 = vset.pattern.permute.xlu0 0
  %51 = vperm.xlu0 %50, %v33
  %v52 = vpop.permute.xlu0 %51
  %55 = vset.pattern.permute.xlu0 0
  %56 = vperm.xlu0 %55, %v34
  %v57 = vpop.permute.xlu0 %56
  %60 = vset.pattern.permute.xlu0 0
  %61 = vperm.xlu0 %60, %v35
  %v62 = vpop.permute.xlu0 %61
  %65 = vset.pattern.permute.xlu0 0
  %66 = vperm.xlu0 %65, %v36
  %v67 = vpop.permute.xlu0 %66
  %70 = vset.pattern.permute.xlu0 0
  %71 = vperm.xlu0 %70, %v37
  %v72 = vpop.permute.xlu0 %71
  %75 = vset.pattern.permute.xlu0 0
  %76 = vperm.xlu0 %75, %v38
  %v77 = vpop.permute.xlu0 %76
  %v80 = vlaneseq
  %v81 = vshrl.u32 %v80, 7
  %v82 = vsub.s32 0, %v81
  %v83 = vrot.slane %v25, %v82
  %v85 = vmul.f32 %v42, %v83
  %v86 = vmul.f32 %v47, %v83
  %v87 = vmul.f32 %v52, %v83
  %v88 = vmul.f32 %v57, %v83
  %v89 = vmul.f32 %v62, %v83
  %v90 = vmul.f32 %v67, %v83
  %v91 = vmul.f32 %v72, %v83
  %v92 = vmul.f32 %v77, %v83
  %v94 = vlaneseq
  %v95 = vshrl.u32 %v94, 7
  %v96 = vsub.s32 0, %v95
  %v97 = vrot.slane %v30, %v96
  %v99 = vadd.f32 %v85, %v97
  %v100 = vadd.f32 %v86, %v97
  %v101 = vadd.f32 %v87, %v97
  %v102 = vadd.f32 %v88, %v97
  %v103 = vadd.f32 %v89, %v97
  %v104 = vadd.f32 %v90, %v97
  %v105 = vadd.f32 %v91, %v97
  %v106 = vadd.f32 %v92, %v97
  %vm107 = vcmask 261120
  %v109 = vsel %vm107, 0.0, 0
  %111 = vmatprep.subr.mxu0 0.0
  %112 = vmatpush1.msra.mxu0 %v26
  %113 = vmatprep.subr.mxu0 0.0
  %114 = vmatpush1.msra.mxu0 %v27
  %115 = vmatprep.subr.mxu0 0.0
  %116 = vmatpush1.msra.mxu0 %v28
  %117 = vmatprep.subr.mxu0 0.0
  %118 = vmatpush1.msra.mxu0 %v29
  %119 = vmatprep.subr.mxu0 0.0
  %120 = vmatpush1.msra.mxu0 0.0
  %121 = vmatprep.subr.mxu0 0.0
  %122 = vmatpush1.msra.mxu0 0.0
  %123 = vmatprep.subr.mxu0 0.0
  %124 = vmatpush1.msra.mxu0 0.0
  %125 = vmatprep.subr.mxu0 0.0
  %126 = vmatpush1.msra.mxu0 0.0
  %127 = vmatprep.subr.mxu0 0.0
  %128 = vmatpush1.msra.mxu0 0.0
  %129 = vmatprep.subr.mxu0 0.0
  %130 = vmatpush1.msra.mxu0 0.0
  %131 = vmatprep.subr.mxu0 0.0
  %132 = vmatpush1.msra.mxu0 0.0
  %133 = vmatprep.subr.mxu0 0.0
  %134 = vmatpush1.msra.mxu0 0.0
  %135 = vmatprep.subr.mxu0 0.0
  %136 = vmatpush1.msra.mxu0 0.0
  %137 = vmatprep.subr.mxu0 0.0
  %138 = vmatpush1.msra.mxu0 0.0
  %139 = vmatprep.subr.mxu0 0.0
  %140 = vmatpush1.msra.mxu0 0.0
  %141 = vmatprep.subr.mxu0 0.0
  %142 = vmatpush1.msra.mxu0 0.0
  %143 = vmatprep.subr.mxu0 0.0
  %144 = vmatpush1.msra.mxu0 0.0
  %145 = vmatprep.subr.mxu0 0.0
  %146 = vmatpush1.msra.mxu0 0.0
  %147 = vmatprep.subr.mxu0 0.0
  %148 = vmatpush1.msra.mxu0 0.0
  %149 = vmatprep.subr.mxu0 0.0
  %150 = vmatpush1.msra.mxu0 0.0
  %151 = vmatprep.subr.mxu0 0.0
  %152 = vmatpush1.msra.mxu0 0.0
  %153 = vmatprep.subr.mxu0 0.0
  %154 = vmatpush1.msra.mxu0 0.0
  %155 = vmatprep.subr.mxu0 0.0
  %156 = vmatpush1.msra.mxu0 0.0
  %157 = vmatprep.subr.mxu0 0.0
  %158 = vmatpush1.msra.mxu0 0.0
  %159 = vmatprep.subr.mxu0 0.0
  %160 = vmatpush1.msra.mxu0 0.0
  %161 = vmatprep.subr.mxu0 0.0
  %162 = vmatpush1.msra.mxu0 0.0
  %163 = vmatprep.subr.mxu0 0.0
  %164 = vmatpush1.msra.mxu0 0.0
  %165 = vmatprep.subr.mxu0 0.0
  %166 = vmatpush1.msra.mxu0 0.0
  %167 = vmatprep.subr.mxu0 0.0
  %168 = vmatpush1.msra.mxu0 0.0
  %169 = vmatprep.subr.mxu0 0.0
  %170 = vmatpush1.msra.mxu0 0.0
  %171 = vmatprep.subr.mxu0 0.0
  %172 = vmatpush1.msra.mxu0 0.0
  %173 = vmatprep.subr.mxu0 0.0
  %174 = vmatpush1.msra.mxu0 0.0
  %175 = vmatprep.mubr.f32.mxu0 0.0
  %176 = vmatmul.mubr.f32.gmra.mrb[0].mxu0 %v109
  %v177 = vpop.f32.mrb[0].mxu0
  %v178 = vadd.f32 0.0, %v177
  %v179 = vpop.f32.mrb[0].mxu0
  %180 = vdwg.mxu0
  %v181 = vadd.f32 %v99, %v178
  %v182 = vxor.u32 %v181, 2147483648
  %v183 = vmul.f32 %v182, 1.442695
  %v184 = vpow.pop %v183
  %v185 = vadd.f32 %v184, 1.0
  %v186 = vrcp.pop %v185
  %v187 = vmul.f32 1.0, %v186
  %v188 = vtanh.pop %v181
  %v189 = vmul.f32 %v187, 0.0
  %191 = vrot.lane.b32.xlu0 %v188, 64
  %v192 = vpop.permute.xlu0 %191
  %v194 = vmul.f32 %v187, %v192
  %196 = vrot.lane.b32.xlu0 %v194, 32
  %v197 = vpop.permute.xlu0 %196
  %v199 = vadd.f32 %v189, %v197
  %v200 = vtanh.pop %v199
  %202 = vrot.lane.b32.xlu0 %v200, 64
  %v203 = vpop.permute.xlu0 %202
  %v205 = vmul.f32 %v187, %v203
  %207 = vrot.lane.b32.xlu0 %v205, 32
  %v208 = vpop.permute.xlu0 %207
  %v209 = vsel %vm107, %v208, 0
  %211 = vmatprep.subr.mxu0 0.0
  %212 = vmatpush1.msra.mxu0 %v26
  %213 = vmatprep.subr.mxu0 0.0
  %214 = vmatpush1.msra.mxu0 %v27
  %215 = vmatprep.subr.mxu0 0.0
  %216 = vmatpush1.msra.mxu0 %v28
  %217 = vmatprep.subr.mxu0 0.0
  %218 = vmatpush1.msra.mxu0 %v29
  %219 = vmatprep.subr.mxu0 0.0
  %220 = vmatpush1.msra.mxu0 0.0
  %221 = vmatprep.subr.mxu0 0.0
  %222 = vmatpush1.msra.mxu0 0.0
  %223 = vmatprep.subr.mxu0 0.0
  %224 = vmatpush1.msra.mxu0 0.0
  %225 = vmatprep.subr.mxu0 0.0
  %226 = vmatpush1.msra.mxu0 0.0
  %227 = vmatprep.subr.mxu0 0.0
  %228 = vmatpush1.msra.mxu0 0.0
  %229 = vmatprep.subr.mxu0 0.0
  %230 = vmatpush1.msra.mxu0 0.0
  %231 = vmatprep.subr.mxu0 0.0
  %232 = vmatpush1.msra.mxu0 0.0
  %233 = vmatprep.subr.mxu0 0.0
  %234 = vmatpush1.msra.mxu0 0.0
  %235 = vmatprep.subr.mxu0 0.0
  %236 = vmatpush1.msra.mxu0 0.0
  %237 = vmatprep.subr.mxu0 0.0
  %238 = vmatpush1.msra.mxu0 0.0
  %239 = vmatprep.subr.mxu0 0.0
  %240 = vmatpush1.msra.mxu0 0.0
  %241 = vmatprep.subr.mxu0 0.0
  %242 = vmatpush1.msra.mxu0 0.0
  %243 = vmatprep.subr.mxu0 0.0
  %244 = vmatpush1.msra.mxu0 0.0
  %245 = vmatprep.subr.mxu0 0.0
  %246 = vmatpush1.msra.mxu0 0.0
  %247 = vmatprep.subr.mxu0 0.0
  %248 = vmatpush1.msra.mxu0 0.0
  %249 = vmatprep.subr.mxu0 0.0
  %250 = vmatpush1.msra.mxu0 0.0
  %251 = vmatprep.subr.mxu0 0.0
  %252 = vmatpush1.msra.mxu0 0.0
  %253 = vmatprep.subr.mxu0 0.0
  %254 = vmatpush1.msra.mxu0 0.0
  %255 = vmatprep.subr.mxu0 0.0
  %256 = vmatpush1.msra.mxu0 0.0
  %257 = vmatprep.subr.mxu0 0.0
  %258 = vmatpush1.msra.mxu0 0.0
  %259 = vmatprep.subr.mxu0 0.0
  %260 = vmatpush1.msra.mxu0 0.0
  %261 = vmatprep.subr.mxu0 0.0
  %262 = vmatpush1.msra.mxu0 0.0
  %263 = vmatprep.subr.mxu0 0.0
  %264 = vmatpush1.msra.mxu0 0.0
  %265 = vmatprep.subr.mxu0 0.0
  %266 = vmatpush1.msra.mxu0 0.0
  %267 = vmatprep.subr.mxu0 0.0
  %268 = vmatpush1.msra.mxu0 0.0
  %269 = vmatprep.subr.mxu0 0.0
  %270 = vmatpush1.msra.mxu0 0.0
  %271 = vmatprep.subr.mxu0 0.0
  %272 = vmatpush1.msra.mxu0 0.0
  %273 = vmatprep.subr.mxu0 0.0
  %274 = vmatpush1.msra.mxu0 0.0
  %275 = vmatprep.mubr.f32.mxu0 0.0
  %276 = vmatmul.mubr.f32.gmra.mrb[0].mxu0 %v209
  %v277 = vpop.f32.mrb[0].mxu0
  %v278 = vadd.f32 0.0, %v277
  %v279 = vpop.f32.mrb[0].mxu0
  %280 = vdwg.mxu0
  %v281 = vadd.f32 %v100, %v278
  %v282 = vxor.u32 %v281, 2147483648
  %v283 = vmul.f32 %v282, 1.442695
  %v284 = vpow.pop %v283
  %v285 = vadd.f32 %v284, 1.0
  %v286 = vrcp.pop %v285
  %v287 = vmul.f32 1.0, %v286
  %v288 = vtanh.pop %v281
  %v289 = vmul.f32 %v287, %v199
  %291 = vrot.lane.b32.xlu0 %v288, 64
  %v292 = vpop.permute.xlu0 %291
  %v294 = vmul.f32 %v287, %v292
  %296 = vrot.lane.b32.xlu0 %v294, 32
  %v297 = vpop.permute.xlu0 %296
  %v299 = vadd.f32 %v289, %v297
  %v300 = vtanh.pop %v299
  %302 = vrot.lane.b32.xlu0 %v300, 64
  %v303 = vpop.permute.xlu0 %302
  %v305 = vmul.f32 %v287, %v303
  %307 = vrot.lane.b32.xlu0 %v305, 32
  %v308 = vpop.permute.xlu0 %307
  %v309 = vsel %vm107, %v308, 0
  %311 = vmatprep.subr.mxu0 0.0
  %312 = vmatpush1.msra.mxu0 %v26
  %313 = vmatprep.subr.mxu0 0.0
  %314 = vmatpush1.msra.mxu0 %v27
  %315 = vmatprep.subr.mxu0 0.0
  %316 = vmatpush1.msra.mxu0 %v28
  %317 = vmatprep.subr.mxu0 0.0
  %318 = vmatpush1.msra.mxu0 %v29
  %319 = vmatprep.subr.mxu0 0.0
  %320 = vmatpush1.msra.mxu0 0.0
  %321 = vmatprep.subr.mxu0 0.0
  %322 = vmatpush1.msra.mxu0 0.0
  %323 = vmatprep.subr.mxu0 0.0
  %324 = vmatpush1.msra.mxu0 0.0
  %325 = vmatprep.subr.mxu0 0.0
  %326 = vmatpush1.msra.mxu0 0.0
  %327 = vmatprep.subr.mxu0 0.0
  %328 = vmatpush1.msra.mxu0 0.0
  %329 = vmatprep.subr.mxu0 0.0
  %330 = vmatpush1.msra.mxu0 0.0
  %331 = vmatprep.subr.mxu0 0.0
  %332 = vmatpush1.msra.mxu0 0.0
  %333 = vmatprep.subr.mxu0 0.0
  %334 = vmatpush1.msra.mxu0 0.0
  %335 = vmatprep.subr.mxu0 0.0
  %336 = vmatpush1.msra.mxu0 0.0
  %337 = vmatprep.subr.mxu0 0.0
  %338 = vmatpush1.msra.mxu0 0.0
  %339 = vmatprep.subr.mxu0 0.0
  %340 = vmatpush1.msra.mxu0 0.0
  %341 = vmatprep.subr.mxu0 0.0
  %342 = vmatpush1.msra.mxu0 0.0
  %343 = vmatprep.subr.mxu0 0.0
  %344 = vmatpush1.msra.mxu0 0.0
  %345 = vmatprep.subr.mxu0 0.0
  %346 = vmatpush1.msra.mxu0 0.0
  %347 = vmatprep.subr.mxu0 0.0
  %348 = vmatpush1.msra.mxu0 0.0
  %349 = vmatprep.subr.mxu0 0.0
  %350 = vmatpush1.msra.mxu0 0.0
  %351 = vmatprep.subr.mxu0 0.0
  %352 = vmatpush1.msra.mxu0 0.0
  %353 = vmatprep.subr.mxu0 0.0
  %354 = vmatpush1.msra.mxu0 0.0
  %355 = vmatprep.subr.mxu0 0.0
  %356 = vmatpush1.msra.mxu0 0.0
  %357 = vmatprep.subr.mxu0 0.0
  %358 = vmatpush1.msra.mxu0 0.0
  %359 = vmatprep.subr.mxu0 0.0
  %360 = vmatpush1.msra.mxu0 0.0
  %361 = vmatprep.subr.mxu0 0.0
  %362 = vmatpush1.msra.mxu0 0.0
  %363 = vmatprep.subr.mxu0 0.0
  %364 = vmatpush1.msra.mxu0 0.0
  %365 = vmatprep.subr.mxu0 0.0
  %366 = vmatpush1.msra.mxu0 0.0
  %367 = vmatprep.subr.mxu0 0.0
  %368 = vmatpush1.msra.mxu0 0.0
  %369 = vmatprep.subr.mxu0 0.0
  %370 = vmatpush1.msra.mxu0 0.0
  %371 = vmatprep.subr.mxu0 0.0
  %372 = vmatpush1.msra.mxu0 0.0
  %373 = vmatprep.subr.mxu0 0.0
  %374 = vmatpush1.msra.mxu0 0.0
  %375 = vmatprep.mubr.f32.mxu0 0.0
  %376 = vmatmul.mubr.f32.gmra.mrb[0].mxu0 %v309
  %v377 = vpop.f32.mrb[0].mxu0
  %v378 = vadd.f32 0.0, %v377
  %v379 = vpop.f32.mrb[0].mxu0
  %380 = vdwg.mxu0
  %v381 = vadd.f32 %v101, %v378
  %v382 = vxor.u32 %v381, 2147483648
  %v383 = vmul.f32 %v382, 1.442695
  %v384 = vpow.pop %v383
  %v385 = vadd.f32 %v384, 1.0
  %v386 = vrcp.pop %v385
  %v387 = vmul.f32 1.0, %v386
  %v388 = vtanh.pop %v381
  %v389 = vmul.f32 %v387, %v299
  %391 = vrot.lane.b32.xlu0 %v388, 64
  %v392 = vpop.permute.xlu0 %391
  %v394 = vmul.f32 %v387, %v392
  %396 = vrot.lane.b32.xlu0 %v394, 32
  %v397 = vpop.permute.xlu0 %396
  %v399 = vadd.f32 %v389, %v397
  %v400 = vtanh.pop %v399
  %402 = vrot.lane.b32.xlu0 %v400, 64
  %v403 = vpop.permute.xlu0 %402
  %v405 = vmul.f32 %v387, %v403
  %407 = vrot.lane.b32.xlu0 %v405, 32
  %v408 = vpop.permute.xlu0 %407
  %v409 = vsel %vm107, %v408, 0
  %411 = vmatprep.subr.mxu0 0.0
  %412 = vmatpush1.msra.mxu0 %v26
  %413 = vmatprep.subr.mxu0 0.0
  %414 = vmatpush1.msra.mxu0 %v27
  %415 = vmatprep.subr.mxu0 0.0
  %416 = vmatpush1.msra.mxu0 %v28
  %417 = vmatprep.subr.mxu0 0.0
  %418 = vmatpush1.msra.mxu0 %v29
  %419 = vmatprep.subr.mxu0 0.0
  %420 = vmatpush1.msra.mxu0 0.0
  %421 = vmatprep.subr.mxu0 0.0
  %422 = vmatpush1.msra.mxu0 0.0
  %423 = vmatprep.subr.mxu0 0.0
  %424 = vmatpush1.msra.mxu0 0.0
  %425 = vmatprep.subr.mxu0 0.0
  %426 = vmatpush1.msra.mxu0 0.0
  %427 = vmatprep.subr.mxu0 0.0
  %428 = vmatpush1.msra.mxu0 0.0
  %429 = vmatprep.subr.mxu0 0.0
  %430 = vmatpush1.msra.mxu0 0.0
  %431 = vmatprep.subr.mxu0 0.0
  %432 = vmatpush1.msra.mxu0 0.0
  %433 = vmatprep.subr.mxu0 0.0
  %434 = vmatpush1.msra.mxu0 0.0
  %435 = vmatprep.subr.mxu0 0.0
  %436 = vmatpush1.msra.mxu0 0.0
  %437 = vmatprep.subr.mxu0 0.0
  %438 = vmatpush1.msra.mxu0 0.0
  %439 = vmatprep.subr.mxu0 0.0
  %440 = vmatpush1.msra.mxu0 0.0
  %441 = vmatprep.subr.mxu0 0.0
  %442 = vmatpush1.msra.mxu0 0.0
  %443 = vmatprep.subr.mxu0 0.0
  %444 = vmatpush1.msra.mxu0 0.0
  %445 = vmatprep.subr.mxu0 0.0
  %446 = vmatpush1.msra.mxu0 0.0
  %447 = vmatprep.subr.mxu0 0.0
  %448 = vmatpush1.msra.mxu0 0.0
  %449 = vmatprep.subr.mxu0 0.0
  %450 = vmatpush1.msra.mxu0 0.0
  %451 = vmatprep.subr.mxu0 0.0
  %452 = vmatpush1.msra.mxu0 0.0
  %453 = vmatprep.subr.mxu0 0.0
  %454 = vmatpush1.msra.mxu0 0.0
  %455 = vmatprep.subr.mxu0 0.0
  %456 = vmatpush1.msra.mxu0 0.0
  %457 = vmatprep.subr.mxu0 0.0
  %458 = vmatpush1.msra.mxu0 0.0
  %459 = vmatprep.subr.mxu0 0.0
  %460 = vmatpush1.msra.mxu0 0.0
  %461 = vmatprep.subr.mxu0 0.0
  %462 = vmatpush1.msra.mxu0 0.0
  %463 = vmatprep.subr.mxu0 0.0
  %464 = vmatpush1.msra.mxu0 0.0
  %465 = vmatprep.subr.mxu0 0.0
  %466 = vmatpush1.msra.mxu0 0.0
  %467 = vmatprep.subr.mxu0 0.0
  %468 = vmatpush1.msra.mxu0 0.0
  %469 = vmatprep.subr.mxu0 0.0
  %470 = vmatpush1.msra.mxu0 0.0
  %471 = vmatprep.subr.mxu0 0.0
  %472 = vmatpush1.msra.mxu0 0.0
  %473 = vmatprep.subr.mxu0 0.0
  %474 = vmatpush1.msra.mxu0 0.0
  %475 = vmatprep.mubr.f32.mxu0 0.0
  %476 = vmatmul.mubr.f32.gmra.mrb[0].mxu0 %v409
  %v477 = vpop.f32.mrb[0].mxu0
  %v478 = vadd.f32 0.0, %v477
  %v479 = vpop.f32.mrb[0].mxu0
  %480 = vdwg.mxu0
  %v481 = vadd.f32 %v102, %v478
  %v482 = vxor.u32 %v481, 2147483648
  %v483 = vmul.f32 %v482, 1.442695
  %v484 = vpow.pop %v483
  %v485 = vadd.f32 %v484, 1.0
  %v486 = vrcp.pop %v485
  %v487 = vmul.f32 1.0, %v486
  %v488 = vtanh.pop %v481
  %v489 = vmul.f32 %v487, %v399
  %491 = vrot.lane.b32.xlu0 %v488, 64
  %v492 = vpop.permute.xlu0 %491
  %v494 = vmul.f32 %v487, %v492
  %496 = vrot.lane.b32.xlu0 %v494, 32
  %v497 = vpop.permute.xlu0 %496
  %v499 = vadd.f32 %v489, %v497
  %v500 = vtanh.pop %v499
  %502 = vrot.lane.b32.xlu0 %v500, 64
  %v503 = vpop.permute.xlu0 %502
  %v505 = vmul.f32 %v487, %v503
  %507 = vrot.lane.b32.xlu0 %v505, 32
  %v508 = vpop.permute.xlu0 %507
  %v509 = vsel %vm107, %v508, 0
  %511 = vmatprep.subr.mxu0 0.0
  %512 = vmatpush1.msra.mxu0 %v26
  %513 = vmatprep.subr.mxu0 0.0
  %514 = vmatpush1.msra.mxu0 %v27
  %515 = vmatprep.subr.mxu0 0.0
  %516 = vmatpush1.msra.mxu0 %v28
  %517 = vmatprep.subr.mxu0 0.0
  %518 = vmatpush1.msra.mxu0 %v29
  %519 = vmatprep.subr.mxu0 0.0
  %520 = vmatpush1.msra.mxu0 0.0
  %521 = vmatprep.subr.mxu0 0.0
  %522 = vmatpush1.msra.mxu0 0.0
  %523 = vmatprep.subr.mxu0 0.0
  %524 = vmatpush1.msra.mxu0 0.0
  %525 = vmatprep.subr.mxu0 0.0
  %526 = vmatpush1.msra.mxu0 0.0
  %527 = vmatprep.subr.mxu0 0.0
  %528 = vmatpush1.msra.mxu0 0.0
  %529 = vmatprep.subr.mxu0 0.0
  %530 = vmatpush1.msra.mxu0 0.0
  %531 = vmatprep.subr.mxu0 0.0
  %532 = vmatpush1.msra.mxu0 0.0
  %533 = vmatprep.subr.mxu0 0.0
  %534 = vmatpush1.msra.mxu0 0.0
  %535 = vmatprep.subr.mxu0 0.0
  %536 = vmatpush1.msra.mxu0 0.0
  %537 = vmatprep.subr.mxu0 0.0
  %538 = vmatpush1.msra.mxu0 0.0
  %539 = vmatprep.subr.mxu0 0.0
  %540 = vmatpush1.msra.mxu0 0.0
  %541 = vmatprep.subr.mxu0 0.0
  %542 = vmatpush1.msra.mxu0 0.0
  %543 = vmatprep.subr.mxu0 0.0
  %544 = vmatpush1.msra.mxu0 0.0
  %545 = vmatprep.subr.mxu0 0.0
  %546 = vmatpush1.msra.mxu0 0.0
  %547 = vmatprep.subr.mxu0 0.0
  %548 = vmatpush1.msra.mxu0 0.0
  %549 = vmatprep.subr.mxu0 0.0
  %550 = vmatpush1.msra.mxu0 0.0
  %551 = vmatprep.subr.mxu0 0.0
  %552 = vmatpush1.msra.mxu0 0.0
  %553 = vmatprep.subr.mxu0 0.0
  %554 = vmatpush1.msra.mxu0 0.0
  %555 = vmatprep.subr.mxu0 0.0
  %556 = vmatpush1.msra.mxu0 0.0
  %557 = vmatprep.subr.mxu0 0.0
  %558 = vmatpush1.msra.mxu0 0.0
  %559 = vmatprep.subr.mxu0 0.0
  %560 = vmatpush1.msra.mxu0 0.0
  %561 = vmatprep.subr.mxu0 0.0
  %562 = vmatpush1.msra.mxu0 0.0
  %563 = vmatprep.subr.mxu0 0.0
  %564 = vmatpush1.msra.mxu0 0.0
  %565 = vmatprep.subr.mxu0 0.0
  %566 = vmatpush1.msra.mxu0 0.0
  %567 = vmatprep.subr.mxu0 0.0
  %568 = vmatpush1.msra.mxu0 0.0
  %569 = vmatprep.subr.mxu0 0.0
  %570 = vmatpush1.msra.mxu0 0.0
  %571 = vmatprep.subr.mxu0 0.0
  %572 = vmatpush1.msra.mxu0 0.0
  %573 = vmatprep.subr.mxu0 0.0
  %574 = vmatpush1.msra.mxu0 0.0
  %575 = vmatprep.mubr.f32.mxu0 0.0
  %576 = vmatmul.mubr.f32.gmra.mrb[0].mxu0 %v509
  %v577 = vpop.f32.mrb[0].mxu0
  %v578 = vadd.f32 0.0, %v577
  %v579 = vpop.f32.mrb[0].mxu0
  %580 = vdwg.mxu0
  %v581 = vadd.f32 %v103, %v578
  %v582 = vxor.u32 %v581, 2147483648
  %v583 = vmul.f32 %v582, 1.442695
  %v584 = vpow.pop %v583
  %v585 = vadd.f32 %v584, 1.0
  %v586 = vrcp.pop %v585
  %v587 = vmul.f32 1.0, %v586
  %v588 = vtanh.pop %v581
  %v589 = vmul.f32 %v587, %v499
  %591 = vrot.lane.b32.xlu0 %v588, 64
  %v592 = vpop.permute.xlu0 %591
  %v594 = vmul.f32 %v587, %v592
  %596 = vrot.lane.b32.xlu0 %v594, 32
  %v597 = vpop.permute.xlu0 %596
  %v599 = vadd.f32 %v589, %v597
  %v600 = vtanh.pop %v599
  %602 = vrot.lane.b32.xlu0 %v600, 64
  %v603 = vpop.permute.xlu0 %602
  %v605 = vmul.f32 %v587, %v603
  %607 = vrot.lane.b32.xlu0 %v605, 32
  %v608 = vpop.permute.xlu0 %607
  %v609 = vsel %vm107, %v608, 0
  %611 = vmatprep.subr.mxu0 0.0
  %612 = vmatpush1.msra.mxu0 %v26
  %613 = vmatprep.subr.mxu0 0.0
  %614 = vmatpush1.msra.mxu0 %v27
  %615 = vmatprep.subr.mxu0 0.0
  %616 = vmatpush1.msra.mxu0 %v28
  %617 = vmatprep.subr.mxu0 0.0
  %618 = vmatpush1.msra.mxu0 %v29
  %619 = vmatprep.subr.mxu0 0.0
  %620 = vmatpush1.msra.mxu0 0.0
  %621 = vmatprep.subr.mxu0 0.0
  %622 = vmatpush1.msra.mxu0 0.0
  %623 = vmatprep.subr.mxu0 0.0
  %624 = vmatpush1.msra.mxu0 0.0
  %625 = vmatprep.subr.mxu0 0.0
  %626 = vmatpush1.msra.mxu0 0.0
  %627 = vmatprep.subr.mxu0 0.0
  %628 = vmatpush1.msra.mxu0 0.0
  %629 = vmatprep.subr.mxu0 0.0
  %630 = vmatpush1.msra.mxu0 0.0
  %631 = vmatprep.subr.mxu0 0.0
  %632 = vmatpush1.msra.mxu0 0.0
  %633 = vmatprep.subr.mxu0 0.0
  %634 = vmatpush1.msra.mxu0 0.0
  %635 = vmatprep.subr.mxu0 0.0
  %636 = vmatpush1.msra.mxu0 0.0
  %637 = vmatprep.subr.mxu0 0.0
  %638 = vmatpush1.msra.mxu0 0.0
  %639 = vmatprep.subr.mxu0 0.0
  %640 = vmatpush1.msra.mxu0 0.0
  %641 = vmatprep.subr.mxu0 0.0
  %642 = vmatpush1.msra.mxu0 0.0
  %643 = vmatprep.subr.mxu0 0.0
  %644 = vmatpush1.msra.mxu0 0.0
  %645 = vmatprep.subr.mxu0 0.0
  %646 = vmatpush1.msra.mxu0 0.0
  %647 = vmatprep.subr.mxu0 0.0
  %648 = vmatpush1.msra.mxu0 0.0
  %649 = vmatprep.subr.mxu0 0.0
  %650 = vmatpush1.msra.mxu0 0.0
  %651 = vmatprep.subr.mxu0 0.0
  %652 = vmatpush1.msra.mxu0 0.0
  %653 = vmatprep.subr.mxu0 0.0
  %654 = vmatpush1.msra.mxu0 0.0
  %655 = vmatprep.subr.mxu0 0.0
  %656 = vmatpush1.msra.mxu0 0.0
  %657 = vmatprep.subr.mxu0 0.0
  %658 = vmatpush1.msra.mxu0 0.0
  %659 = vmatprep.subr.mxu0 0.0
  %660 = vmatpush1.msra.mxu0 0.0
  %661 = vmatprep.subr.mxu0 0.0
  %662 = vmatpush1.msra.mxu0 0.0
  %663 = vmatprep.subr.mxu0 0.0
  %664 = vmatpush1.msra.mxu0 0.0
  %665 = vmatprep.subr.mxu0 0.0
  %666 = vmatpush1.msra.mxu0 0.0
  %667 = vmatprep.subr.mxu0 0.0
  %668 = vmatpush1.msra.mxu0 0.0
  %669 = vmatprep.subr.mxu0 0.0
  %670 = vmatpush1.msra.mxu0 0.0
  %671 = vmatprep.subr.mxu0 0.0
  %672 = vmatpush1.msra.mxu0 0.0
  %673 = vmatprep.subr.mxu0 0.0
  %674 = vmatpush1.msra.mxu0 0.0
  %675 = vmatprep.mubr.f32.mxu0 0.0
  %676 = vmatmul.mubr.f32.gmra.mrb[0].mxu0 %v609
  %v677 = vpop.f32.mrb[0].mxu0
  %v678 = vadd.f32 0.0, %v677
  %v679 = vpop.f32.mrb[0].mxu0
  %680 = vdwg.mxu0
  %v681 = vadd.f32 %v104, %v678
  %v682 = vxor.u32 %v681, 2147483648
  %v683 = vmul.f32 %v682, 1.442695
  %v684 = vpow.pop %v683
  %v685 = vadd.f32 %v684, 1.0
  %v686 = vrcp.pop %v685
  %v687 = vmul.f32 1.0, %v686
  %v688 = vtanh.pop %v681
  %v689 = vmul.f32 %v687, %v599
  %691 = vrot.lane.b32.xlu0 %v688, 64
  %v692 = vpop.permute.xlu0 %691
  %v694 = vmul.f32 %v687, %v692
  %696 = vrot.lane.b32.xlu0 %v694, 32
  %v697 = vpop.permute.xlu0 %696
  %v699 = vadd.f32 %v689, %v697
  %v700 = vtanh.pop %v699
  %702 = vrot.lane.b32.xlu0 %v700, 64
  %v703 = vpop.permute.xlu0 %702
  %v705 = vmul.f32 %v687, %v703
  %707 = vrot.lane.b32.xlu0 %v705, 32
  %v708 = vpop.permute.xlu0 %707
  %v709 = vsel %vm107, %v708, 0
  %711 = vmatprep.subr.mxu0 0.0
  %712 = vmatpush1.msra.mxu0 %v26
  %713 = vmatprep.subr.mxu0 0.0
  %714 = vmatpush1.msra.mxu0 %v27
  %715 = vmatprep.subr.mxu0 0.0
  %716 = vmatpush1.msra.mxu0 %v28
  %717 = vmatprep.subr.mxu0 0.0
  %718 = vmatpush1.msra.mxu0 %v29
  %719 = vmatprep.subr.mxu0 0.0
  %720 = vmatpush1.msra.mxu0 0.0
  %721 = vmatprep.subr.mxu0 0.0
  %722 = vmatpush1.msra.mxu0 0.0
  %723 = vmatprep.subr.mxu0 0.0
  %724 = vmatpush1.msra.mxu0 0.0
  %725 = vmatprep.subr.mxu0 0.0
  %726 = vmatpush1.msra.mxu0 0.0
  %727 = vmatprep.subr.mxu0 0.0
  %728 = vmatpush1.msra.mxu0 0.0
  %729 = vmatprep.subr.mxu0 0.0
  %730 = vmatpush1.msra.mxu0 0.0
  %731 = vmatprep.subr.mxu0 0.0
  %732 = vmatpush1.msra.mxu0 0.0
  %733 = vmatprep.subr.mxu0 0.0
  %734 = vmatpush1.msra.mxu0 0.0
  %735 = vmatprep.subr.mxu0 0.0
  %736 = vmatpush1.msra.mxu0 0.0
  %737 = vmatprep.subr.mxu0 0.0
  %738 = vmatpush1.msra.mxu0 0.0
  %739 = vmatprep.subr.mxu0 0.0
  %740 = vmatpush1.msra.mxu0 0.0
  %741 = vmatprep.subr.mxu0 0.0
  %742 = vmatpush1.msra.mxu0 0.0
  %743 = vmatprep.subr.mxu0 0.0
  %744 = vmatpush1.msra.mxu0 0.0
  %745 = vmatprep.subr.mxu0 0.0
  %746 = vmatpush1.msra.mxu0 0.0
  %747 = vmatprep.subr.mxu0 0.0
  %748 = vmatpush1.msra.mxu0 0.0
  %749 = vmatprep.subr.mxu0 0.0
  %750 = vmatpush1.msra.mxu0 0.0
  %751 = vmatprep.subr.mxu0 0.0
  %752 = vmatpush1.msra.mxu0 0.0
  %753 = vmatprep.subr.mxu0 0.0
  %754 = vmatpush1.msra.mxu0 0.0
  %755 = vmatprep.subr.mxu0 0.0
  %756 = vmatpush1.msra.mxu0 0.0
  %757 = vmatprep.subr.mxu0 0.0
  %758 = vmatpush1.msra.mxu0 0.0
  %759 = vmatprep.subr.mxu0 0.0
  %760 = vmatpush1.msra.mxu0 0.0
  %761 = vmatprep.subr.mxu0 0.0
  %762 = vmatpush1.msra.mxu0 0.0
  %763 = vmatprep.subr.mxu0 0.0
  %764 = vmatpush1.msra.mxu0 0.0
  %765 = vmatprep.subr.mxu0 0.0
  %766 = vmatpush1.msra.mxu0 0.0
  %767 = vmatprep.subr.mxu0 0.0
  %768 = vmatpush1.msra.mxu0 0.0
  %769 = vmatprep.subr.mxu0 0.0
  %770 = vmatpush1.msra.mxu0 0.0
  %771 = vmatprep.subr.mxu0 0.0
  %772 = vmatpush1.msra.mxu0 0.0
  %773 = vmatprep.subr.mxu0 0.0
  %774 = vmatpush1.msra.mxu0 0.0
  %775 = vmatprep.mubr.f32.mxu0 0.0
  %776 = vmatmul.mubr.f32.gmra.mrb[0].mxu0 %v709
  %v777 = vpop.f32.mrb[0].mxu0
  %v778 = vadd.f32 0.0, %v777
  %v779 = vpop.f32.mrb[0].mxu0
  %780 = vdwg.mxu0
  %v781 = vadd.f32 %v105, %v778
  %v782 = vxor.u32 %v781, 2147483648
  %v783 = vmul.f32 %v782, 1.442695
  %v784 = vpow.pop %v783
  %v785 = vadd.f32 %v784, 1.0
  %v786 = vrcp.pop %v785
  %v787 = vmul.f32 1.0, %v786
  %v788 = vtanh.pop %v781
  %v789 = vmul.f32 %v787, %v699
  %791 = vrot.lane.b32.xlu0 %v788, 64
  %v792 = vpop.permute.xlu0 %791
  %v794 = vmul.f32 %v787, %v792
  %796 = vrot.lane.b32.xlu0 %v794, 32
  %v797 = vpop.permute.xlu0 %796
  %v799 = vadd.f32 %v789, %v797
  %v800 = vtanh.pop %v799
  %802 = vrot.lane.b32.xlu0 %v800, 64
  %v803 = vpop.permute.xlu0 %802
  %v805 = vmul.f32 %v787, %v803
  %807 = vrot.lane.b32.xlu0 %v805, 32
  %v808 = vpop.permute.xlu0 %807
  %v809 = vsel %vm107, %v808, 0
  %811 = vmatprep.subr.mxu0 0.0
  %812 = vmatpush1.msra.mxu0 %v26
  %813 = vmatprep.subr.mxu0 0.0
  %814 = vmatpush1.msra.mxu0 %v27
  %815 = vmatprep.subr.mxu0 0.0
  %816 = vmatpush1.msra.mxu0 %v28
  %817 = vmatprep.subr.mxu0 0.0
  %818 = vmatpush1.msra.mxu0 %v29
  %819 = vmatprep.subr.mxu0 0.0
  %820 = vmatpush1.msra.mxu0 0.0
  %821 = vmatprep.subr.mxu0 0.0
  %822 = vmatpush1.msra.mxu0 0.0
  %823 = vmatprep.subr.mxu0 0.0
  %824 = vmatpush1.msra.mxu0 0.0
  %825 = vmatprep.subr.mxu0 0.0
  %826 = vmatpush1.msra.mxu0 0.0
  %827 = vmatprep.subr.mxu0 0.0
  %828 = vmatpush1.msra.mxu0 0.0
  %829 = vmatprep.subr.mxu0 0.0
  %830 = vmatpush1.msra.mxu0 0.0
  %831 = vmatprep.subr.mxu0 0.0
  %832 = vmatpush1.msra.mxu0 0.0
  %833 = vmatprep.subr.mxu0 0.0
  %834 = vmatpush1.msra.mxu0 0.0
  %835 = vmatprep.subr.mxu0 0.0
  %836 = vmatpush1.msra.mxu0 0.0
  %837 = vmatprep.subr.mxu0 0.0
  %838 = vmatpush1.msra.mxu0 0.0
  %839 = vmatprep.subr.mxu0 0.0
  %840 = vmatpush1.msra.mxu0 0.0
  %841 = vmatprep.subr.mxu0 0.0
  %842 = vmatpush1.msra.mxu0 0.0
  %843 = vmatprep.subr.mxu0 0.0
  %844 = vmatpush1.msra.mxu0 0.0
  %845 = vmatprep.subr.mxu0 0.0
  %846 = vmatpush1.msra.mxu0 0.0
  %847 = vmatprep.subr.mxu0 0.0
  %848 = vmatpush1.msra.mxu0 0.0
  %849 = vmatprep.subr.mxu0 0.0
  %850 = vmatpush1.msra.mxu0 0.0
  %851 = vmatprep.subr.mxu0 0.0
  %852 = vmatpush1.msra.mxu0 0.0
  %853 = vmatprep.subr.mxu0 0.0
  %854 = vmatpush1.msra.mxu0 0.0
  %855 = vmatprep.subr.mxu0 0.0
  %856 = vmatpush1.msra.mxu0 0.0
  %857 = vmatprep.subr.mxu0 0.0
  %858 = vmatpush1.msra.mxu0 0.0
  %859 = vmatprep.subr.mxu0 0.0
  %860 = vmatpush1.msra.mxu0 0.0
  %861 = vmatprep.subr.mxu0 0.0
  %862 = vmatpush1.msra.mxu0 0.0
  %863 = vmatprep.subr.mxu0 0.0
  %864 = vmatpush1.msra.mxu0 0.0
  %865 = vmatprep.subr.mxu0 0.0
  %866 = vmatpush1.msra.mxu0 0.0
  %867 = vmatprep.subr.mxu0 0.0
  %868 = vmatpush1.msra.mxu0 0.0
  %869 = vmatprep.subr.mxu0 0.0
  %870 = vmatpush1.msra.mxu0 0.0
  %871 = vmatprep.subr.mxu0 0.0
  %872 = vmatpush1.msra.mxu0 0.0
  %873 = vmatprep.subr.mxu0 0.0
  %874 = vmatpush1.msra.mxu0 0.0
  %875 = vmatprep.mubr.f32.mxu0 0.0
  %876 = vmatmul.mubr.f32.gmra.mrb[0].mxu0 %v809
  %v877 = vpop.f32.mrb[0].mxu0
  %v878 = vadd.f32 0.0, %v877
  %v879 = vpop.f32.mrb[0].mxu0
  %880 = vdwg.mxu0
  %v881 = vadd.f32 %v106, %v878
  %v882 = vxor.u32 %v881, 2147483648
  %v883 = vmul.f32 %v882, 1.442695
  %v884 = vpow.pop %v883
  %v885 = vadd.f32 %v884, 1.0
  %v886 = vrcp.pop %v885
  %v887 = vmul.f32 1.0, %v886
  %v888 = vtanh.pop %v881
  %v889 = vmul.f32 %v887, %v799
  %891 = vrot.lane.b32.xlu0 %v888, 64
  %v892 = vpop.permute.xlu0 %891
  %v894 = vmul.f32 %v887, %v892
  %896 = vrot.lane.b32.xlu0 %v894, 32
  %v897 = vpop.permute.xlu0 %896
  %v899 = vadd.f32 %v889, %v897
  %v900 = vtanh.pop %v899
  %902 = vrot.lane.b32.xlu0 %v900, 64
  %v903 = vpop.permute.xlu0 %902
  %v905 = vmul.f32 %v887, %v903
  %v906 = vmax.f32 %v905, 0.0
  %v907 = vld [vmem:[%s4] sm:$0x1]
  %v909 = vlaneseq
  %v910 = vshrl.u32 %v909, 7
  %v911 = vsub.s32 0, %v910
  %v912 = vrot.slane %v907, %v911
  %913 = vrot.lane.b32.xlu0 %v912, 96
  %v914 = vpop.permute.xlu0 %913
  %v916 = vmul.f32 %v906, %v914
  %918 = vrot.lane.b32.xlu0 %v916, 32
  %v919 = vpop.permute.xlu0 %918
  %v921 = vsel %vm107, %v919, 0.0
  %922 = vadd.xlane.f32.xlu0 %v921
  %v923 = vpop.xlane.xlu0 %922
  %v924 = vld [vmem:[#allocation2] sm:$0x1]
  %v926 = vlaneseq
  %v927 = vshrl.u32 %v926, 7
  %v928 = vsub.s32 0, %v927
  %v929 = vrot.slane %v924, %v928
  %v931 = vadd.f32 %v923, %v929
  %vm932 = vcmask 7168
  %933 = vst.msk [vmem:[%s6] sm:$0xff] %vm932, %v931
  // Predicated region
  $region26: #{tpu_custom_call.1} parent=0 // pred_check
    _
  $region27: #{tpu_custom_call.1} parent=0 // pred_check_branch
    %935 = sbr.rel (0) target = $region29
  $region28: #{tpu_custom_call.1} parent=0 // pred_region
    _
  $region29: #{tpu_custom_call.1} parent=0 // pred_fallthru
    _
  // Predicated region
  $region30: #{tpu_custom_call.1} parent=0 // pred_check
    _
  $region31: #{tpu_custom_call.1} parent=0 // pred_check_branch
    %937 = sbr.rel (0) target = $region33
  $region32: #{tpu_custom_call.1} parent=0 // pred_region
    _
  $region33: #{tpu_custom_call.1} parent=0 // pred_fallthru
    _

</llo_original>
